<compile_context>
chip_gen: v7x
topology: tpu7x:2x2x1
jax: 0.10.0
libtpu: 0.0.40
codegen_flags: <defaults>
</compile_context>

<pallas_src>
import functools

import jax
import jax.numpy as jnp
from jax.experimental import pallas as pl
from jax.experimental.pallas import tpu as pltpu

HIDDEN = 128
_MAX_ROWS_PER_TILE = 4096  # keeps VMEM use far below the 32 MiB scoped limit


def _round_up(n, m):
    return ((n + m - 1) // m) * m


def _plan_batch_tiling(batch, max_rows_per_tile=_MAX_ROWS_PER_TILE):
    """Pick (tile_rows, num_tiles) for the batch grid.

    - Rows rounded to 16 (bf16 sublane packing); tiles above 256 rows rounded
      to multiples of 256 (full MXU LHS panels on v6e/v7x; v5e's 128-tall MXU
      is satisfied automatically).
    - Small/medium batches run as a single grid step (overhead-bound regime).
    - Larger batches use an even tile count so dimension_semantics=("parallel",)
      actually feeds both v7x TensorCores; extra steps are harmless on v5e/v6e.
    """
    b16 = _round_up(max(batch, 1), 16)
    if b16 <= 512:                         # one tile: zero per-step overhead
        return b16, 1
    num_tiles = 2                          # even -> both v7x TCs get work
    while pl.cdiv(b16, num_tiles) > max_rows_per_tile:
        num_tiles += 2
    tile = _round_up(pl.cdiv(b16, num_tiles), 256)
    return tile, pl.cdiv(b16, tile)


def dqn_kernel(x_ref, w1_ref, b1_ref, w2_ref, b2_ref, w3_ref, b3_ref, o_ref):
    # x tile arrives f32 from HBM; cast to bf16 in-kernel for the MXU fast path.
    x = x_ref[...].astype(jnp.bfloat16)
    h1 = jnp.dot(x, w1_ref[...], preferred_element_type=jnp.float32)
    h1 = jnp.maximum(h1 + b1_ref[...], 0.0)                    # f32 bias+ReLU (VPU)
    h2 = jnp.dot(h1.astype(jnp.bfloat16), w2_ref[...],
                 preferred_element_type=jnp.float32)
    h2 = jnp.maximum(h2 + b2_ref[...], 0.0)
    out = jnp.dot(h2.astype(jnp.bfloat16), w3_ref[...],
                  preferred_element_type=jnp.float32)
    o_ref[...] = (out + b3_ref[...]).astype(o_ref.dtype)


@jax.jit
def dqn_forward(x, params):
    """x: (B, n_observations) f32. params: pre-transposed bf16 weights, f32 biases."""
    w1, b1 = params["w1"], params["b1"]
    w2, b2 = params["w2"], params["b2"]
    w3, b3 = params["w3"], params["b3"]

    B, n_obs = x.shape
    n_actions = w3.shape[1]

    tb, num_tiles = _plan_batch_tiling(B)
    b_pad = tb * num_tiles
    if b_pad != B:                         # only pad when the tile doesn't divide B
        x = jnp.pad(x, ((0, b_pad - B), (0, 0)))

    # x / out tiled over the batch grid; weights & biases resident (constant map,
    # never re-fetched across grid steps).
    x_spec = pl.BlockSpec((tb, n_obs), lambda i: (i, 0))
    out_spec = pl.BlockSpec((tb, n_actions), lambda i: (i, 0))

    def const_spec(arr):
        return pl.BlockSpec(arr.shape, lambda i: (0, 0))

    flops = 2 * b_pad * (n_obs * HIDDEN + HIDDEN * HIDDEN + HIDDEN * n_actions)
    bytes_accessed = (x.size * 4 + b_pad * n_actions * 4
                      + (w1.size + w2.size + w3.size) * 2
                      + (b1.size + b2.size + b3.size) * 4)

    out = pl.pallas_call(
        dqn_kernel,
        out_shape=jax.ShapeDtypeStruct((b_pad, n_actions), jnp.float32),
        grid=(num_tiles,),
        in_specs=[
            x_spec,
            const_spec(w1), const_spec(b1),
            const_spec(w2), const_spec(b2),
            const_spec(w3), const_spec(b3),
        ],
        out_specs=out_spec,
        compiler_params=pltpu.CompilerParams(
            dimension_semantics=("parallel",),   # megacore sharding on v7x
            vmem_limit_bytes=32 * 1024 * 1024,   # explicit; safe on v5e/v6e/v7x (64 MiB phys)
        ),
        cost_estimate=pl.CostEstimate(
            flops=flops, transcendentals=0, bytes_accessed=bytes_accessed),
    )(x, w1, b1, w2, b2, w3, b3)

    if b_pad != B:
        out = out[:B]
    return out


def init_dqn_params(key, n_observations, n_actions, hidden=HIDDEN):
    """Mimics PyTorch nn.Linear default init U(-1/sqrt(fan_in), +1/sqrt(fan_in)).

    Weights stored pre-transposed as (in, out) in bf16 (MXU fast path); biases
    stored as (1, out) f32 rows so bias+ReLU run in f32 on the VPU.
    """
    keys = jax.random.split(key, 6)

    def linear(kw, kb, fan_in, fan_out):
        bound = 1.0 / jnp.sqrt(fan_in)
        w = jax.random.uniform(kw, (fan_in, fan_out), jnp.float32, -bound, bound)
        b = jax.random.uniform(kb, (1, fan_out), jnp.float32, -bound, bound)
        return w.astype(jnp.bfloat16), b

    w1, b1 = linear(keys[0], keys[1], n_observations, hidden)
    w2, b2 = linear(keys[2], keys[3], hidden, hidden)
    w3, b3 = linear(keys[4], keys[5], hidden, n_actions)
    return {"w1": w1, "b1": b1, "w2": w2, "b2": b2, "w3": w3, "b3": b3}


def dqn_reference(x, params):
    """Pure-JAX reference with the same bf16-weight / f32-accumulate numerics."""
    xb = x.astype(jnp.bfloat16)
    h1 = jnp.maximum(
        jnp.dot(xb, params["w1"], preferred_element_type=jnp.float32)
        + params["b1"], 0.0)
    h2 = jnp.maximum(
        jnp.dot(h1.astype(jnp.bfloat16), params["w2"],
                preferred_element_type=jnp.float32) + params["b2"], 0.0)
    return (jnp.dot(h2.astype(jnp.bfloat16), params["w3"],
                    preferred_element_type=jnp.float32) + params["b3"])


if __name__ == "__main__":
    key = jax.random.PRNGKey(0)
    k_params, k_x = jax.random.split(key)

    # Small shapes: hidden=128 is fixed by the module; obs/action dims are small.
    batch = 64
    n_observations = 8
    n_actions = 4

    params = init_dqn_params(k_params, n_observations, n_actions)
    x = jax.random.normal(k_x, (batch, n_observations), jnp.float32)

    # Aligned batch: single grid step, no pad, no wrapper slice.
    out = jax.block_until_ready(dqn_forward(x, params))
    ref = dqn_reference(x, params)
    assert out.shape == (batch, n_actions)
    assert jnp.allclose(out, ref, atol=1e-2, rtol=1e-2), (
        float(jnp.max(jnp.abs(out - ref))))

    # Ragged batch (exercises the pad + slice path).
    x_small = x[:37]
    out_small = jax.block_until_ready(dqn_forward(x_small, params))
    assert out_small.shape == (37, n_actions)
    assert jnp.allclose(out_small, ref[:37], atol=1e-2, rtol=1e-2)

    # Larger batch (exercises the even multi-tile / megacore path: 2 tiles x 512).
    k_big = jax.random.PRNGKey(1)
    x_big = jax.random.normal(k_big, (1024, n_observations), jnp.float32)
    out_big = jax.block_until_ready(dqn_forward(x_big, params))
    ref_big = dqn_reference(x_big, params)
    assert out_big.shape == (1024, n_actions)
    assert jnp.allclose(out_big, ref_big, atol=1e-2, rtol=1e-2)

    print("KERNEL_OK")
</pallas_src>

<mosaic_0001>
module attributes {stable_mosaic.version = 11 : i64} {
  func.func @dqn_kernel(%arg0: i32, %arg1: memref<64x8xf32, #tpu.memory_space<vmem>>, %arg2: memref<8x128xbf16, #tpu.memory_space<vmem>>, %arg3: memref<1x128xf32, #tpu.memory_space<vmem>>, %arg4: memref<128x128xbf16, #tpu.memory_space<vmem>>, %arg5: memref<1x128xf32, #tpu.memory_space<vmem>>, %arg6: memref<128x4xbf16, #tpu.memory_space<vmem>>, %arg7: memref<1x4xf32, #tpu.memory_space<vmem>>, %arg8: memref<64x4xf32, #tpu.memory_space<vmem>>) attributes {dimension_semantics = [#tpu.dimension_semantics<parallel>], iteration_bounds = array<i64: 1>, scalar_prefetch = 0 : i64, scratch_operands = 0 : i64, tpu.core_type = #tpu.core_type<tc>, window_params = [{transform_indices = @transform_0, window_bounds = array<i64: 64, 8>}, {pipeline_mode = #tpu.pipeline_mode<synchronous>, transform_indices = @transform_1, window_bounds = array<i64: 8, 128>}, {pipeline_mode = #tpu.pipeline_mode<synchronous>, transform_indices = @transform_2, window_bounds = array<i64: 1, 128>}, {pipeline_mode = #tpu.pipeline_mode<synchronous>, transform_indices = @transform_3, window_bounds = array<i64: 128, 128>}, {pipeline_mode = #tpu.pipeline_mode<synchronous>, transform_indices = @transform_4, window_bounds = array<i64: 1, 128>}, {pipeline_mode = #tpu.pipeline_mode<synchronous>, transform_indices = @transform_5, window_bounds = array<i64: 128, 4>}, {pipeline_mode = #tpu.pipeline_mode<synchronous>, transform_indices = @transform_6, window_bounds = array<i64: 1, 4>}, {transform_indices = @transform_7, window_bounds = array<i64: 64, 4>}]} {
    %c0 = arith.constant 0 : index
    %c0_0 = arith.constant 0 : index
    %0 = vector.load %arg1[%c0, %c0_0] : memref<64x8xf32, #tpu.memory_space<vmem>>, vector<64x8xf32>
    %1 = arith.truncf %0 : vector<64x8xf32> to vector<64x8xbf16>
    %c0_1 = arith.constant 0 : index
    %c0_2 = arith.constant 0 : index
    %2 = vector.load %arg2[%c0_1, %c0_2] : memref<8x128xbf16, #tpu.memory_space<vmem>>, vector<8x128xbf16>
    %cst = arith.constant dense<0.000000e+00> : vector<64x128xf32>
    %3 = tpu.matmul %1, %2, %cst {dimension_numbers = #tpu.dot_dimension_numbers<[1], [0], [0], [1], [0, 0, 1, 1], [], []>} : vector<64x8xbf16>, vector<8x128xbf16>, vector<64x128xf32> -> vector<64x128xf32>
    %c0_3 = arith.constant 0 : index
    %c0_4 = arith.constant 0 : index
    %4 = vector.load %arg3[%c0_3, %c0_4] : memref<1x128xf32, #tpu.memory_space<vmem>>, vector<1x128xf32>
    %5 = vector.broadcast %4 : vector<1x128xf32> to vector<64x128xf32>
    %6 = arith.addf %3, %5 : vector<64x128xf32>
    %cst_5 = arith.constant 0.000000e+00 : f32
    %7 = vector.broadcast %cst_5 : f32 to vector<64x128xf32>
    %8 = arith.maximumf %6, %7 : vector<64x128xf32>
    %9 = arith.truncf %8 : vector<64x128xf32> to vector<64x128xbf16>
    %c0_6 = arith.constant 0 : index
    %c0_7 = arith.constant 0 : index
    %10 = vector.load %arg4[%c0_6, %c0_7] : memref<128x128xbf16, #tpu.memory_space<vmem>>, vector<128x128xbf16>
    %cst_8 = arith.constant dense<0.000000e+00> : vector<64x128xf32>
    %11 = tpu.matmul %9, %10, %cst_8 {dimension_numbers = #tpu.dot_dimension_numbers<[1], [0], [0], [1], [0, 0, 1, 1], [], []>} : vector<64x128xbf16>, vector<128x128xbf16>, vector<64x128xf32> -> vector<64x128xf32>
    %c0_9 = arith.constant 0 : index
    %c0_10 = arith.constant 0 : index
    %12 = vector.load %arg5[%c0_9, %c0_10] : memref<1x128xf32, #tpu.memory_space<vmem>>, vector<1x128xf32>
    %13 = vector.broadcast %12 : vector<1x128xf32> to vector<64x128xf32>
    %14 = arith.addf %11, %13 : vector<64x128xf32>
    %cst_11 = arith.constant 0.000000e+00 : f32
    %15 = vector.broadcast %cst_11 : f32 to vector<64x128xf32>
    %16 = arith.maximumf %14, %15 : vector<64x128xf32>
    %17 = arith.truncf %16 : vector<64x128xf32> to vector<64x128xbf16>
    %c0_12 = arith.constant 0 : index
    %c0_13 = arith.constant 0 : index
    %18 = vector.load %arg6[%c0_12, %c0_13] : memref<128x4xbf16, #tpu.memory_space<vmem>>, vector<128x4xbf16>
    %cst_14 = arith.constant dense<0.000000e+00> : vector<64x4xf32>
    %19 = tpu.matmul %17, %18, %cst_14 {dimension_numbers = #tpu.dot_dimension_numbers<[1], [0], [0], [1], [0, 0, 1, 1], [], []>} : vector<64x128xbf16>, vector<128x4xbf16>, vector<64x4xf32> -> vector<64x4xf32>
    %c0_15 = arith.constant 0 : index
    %c0_16 = arith.constant 0 : index
    %20 = vector.load %arg7[%c0_15, %c0_16] : memref<1x4xf32, #tpu.memory_space<vmem>>, vector<1x4xf32>
    %21 = vector.broadcast %20 : vector<1x4xf32> to vector<64x4xf32>
    %22 = arith.addf %19, %21 : vector<64x4xf32>
    %c0_17 = arith.constant 0 : index
    %c0_18 = arith.constant 0 : index
    %23 = vector.load %arg8[%c0_17, %c0_18] : memref<64x4xf32, #tpu.memory_space<vmem>>, vector<64x4xf32>
    tpu.vector_store %arg8[%c0_17, %c0_18], %22 {strides = array<i32>} : memref<64x4xf32, #tpu.memory_space<vmem>>, vector<64x4xf32>,
    return
  }
  func.func @transform_0(%arg0: i32) -> (i32, i32) {
    %c0_i32 = arith.constant 0 : i32
    %c0_i32_0 = arith.constant 0 : i32
    return %arg0, %c0_i32 : i32, i32
  }
  func.func @transform_1(%arg0: i32) -> (i32, i32) {
    %c0_i32 = arith.constant 0 : i32
    %c0_i32_0 = arith.constant 0 : i32
    %c0_i32_1 = arith.constant 0 : i32
    return %c0_i32, %c0_i32_0 : i32, i32
  }
  func.func @transform_2(%arg0: i32) -> (i32, i32) {
    %c0_i32 = arith.constant 0 : i32
    %c0_i32_0 = arith.constant 0 : i32
    %c0_i32_1 = arith.constant 0 : i32
    return %c0_i32, %c0_i32_0 : i32, i32
  }
  func.func @transform_3(%arg0: i32) -> (i32, i32) {
    %c0_i32 = arith.constant 0 : i32
    %c0_i32_0 = arith.constant 0 : i32
    %c0_i32_1 = arith.constant 0 : i32
    return %c0_i32, %c0_i32_0 : i32, i32
  }
  func.func @transform_4(%arg0: i32) -> (i32, i32) {
    %c0_i32 = arith.constant 0 : i32
    %c0_i32_0 = arith.constant 0 : i32
    %c0_i32_1 = arith.constant 0 : i32
    return %c0_i32, %c0_i32_0 : i32, i32
  }
  func.func @transform_5(%arg0: i32) -> (i32, i32) {
    %c0_i32 = arith.constant 0 : i32
    %c0_i32_0 = arith.constant 0 : i32
    %c0_i32_1 = arith.constant 0 : i32
    return %c0_i32, %c0_i32_0 : i32, i32
  }
  func.func @transform_6(%arg0: i32) -> (i32, i32) {
    %c0_i32 = arith.constant 0 : i32
    %c0_i32_0 = arith.constant 0 : i32
    %c0_i32_1 = arith.constant 0 : i32
    return %c0_i32, %c0_i32_0 : i32, i32
  }
  func.func @transform_7(%arg0: i32) -> (i32, i32) {
    %c0_i32 = arith.constant 0 : i32
    %c0_i32_0 = arith.constant 0 : i32
    return %arg0, %c0_i32 : i32, i32
  }
}

</mosaic_0001>

<llo_original>
// kernel: dqn_forward.1
$region0: #{dqn_forward.1}
  #allocation0 [shape = 'u32[]', space=smem, size = 0x4, offset = 0x4, fixed_abs, tag = 'smem constant byte address 0x4 - core index']
  #allocation1 [shape = 'u32[144,128]{1,0:T(1,128)}', space=vmem, size = 0x12000, scoped, tag = 'internal scratch']
  %s0 = inlined_call_operand.vmem [shape: f32[64,8], index: 0, kind: input, shape index: {}]
  %s1 = inlined_call_operand.vmem [shape: bf16[8,128], index: 1, kind: input, shape index: {}]
  %s2 = inlined_call_operand.vmem [shape: f32[1,128], index: 2, kind: input, shape index: {}]
  %s3 = inlined_call_operand.vmem [shape: bf16[128,128], index: 3, kind: input, shape index: {}]
  %s4 = inlined_call_operand.vmem [shape: f32[1,128], index: 4, kind: input, shape index: {}]
  %s5 = inlined_call_operand.vmem [shape: bf16[128,4], index: 5, kind: input, shape index: {}]
  %s6 = inlined_call_operand.vmem [shape: f32[1,4], index: 6, kind: input, shape index: {}]
  %s7 = inlined_call_operand.vmem [shape: f32[64,4], index: 7, kind: output, shape index: {}]
  %s8 = sld [smem:[#allocation0]]
  $region38: #{dqn_forward.1} parent=0
    _
  %s10 = ssub.s32 1, %s8
  %s11 = scalar_select 0, %s10, %s8
  // Predicated region
  $region2: #{dqn_forward.1} parent=0 // pred_check
    _
  $region3: #{dqn_forward.1} parent=0 // pred_check_branch
    %13 = sbr.rel (0) target = $region5
  $region4: #{dqn_forward.1} parent=0 // pred_region
    _
  $region5: #{dqn_forward.1} parent=0 // pred_fallthru
    _
  // Predicated region
  $region6: #{dqn_forward.1} parent=0 // pred_check
    _
  $region7: #{dqn_forward.1} parent=0 // pred_check_branch
    %15 = sbr.rel (0) target = $region9
  $region8: #{dqn_forward.1} parent=0 // pred_region
    _
  $region9: #{dqn_forward.1} parent=0 // pred_fallthru
    _
  // Predicated region
  $region10: #{dqn_forward.1} parent=0 // pred_check
    _
  $region11: #{dqn_forward.1} parent=0 // pred_check_branch
    %17 = sbr.rel (0) target = $region13
  $region12: #{dqn_forward.1} parent=0 // pred_region
    _
  $region13: #{dqn_forward.1} parent=0 // pred_fallthru
    _
  // Predicated region
  $region14: #{dqn_forward.1} parent=0 // pred_check
    _
  $region15: #{dqn_forward.1} parent=0 // pred_check_branch
    %19 = sbr.rel (0) target = $region17
  $region16: #{dqn_forward.1} parent=0 // pred_region
    _
  $region17: #{dqn_forward.1} parent=0 // pred_fallthru
    _
  // Predicated region
  $region18: #{dqn_forward.1} parent=0 // pred_check
    _
  $region19: #{dqn_forward.1} parent=0 // pred_check_branch
    %21 = sbr.rel (0) target = $region21
  $region20: #{dqn_forward.1} parent=0 // pred_region
    _
  $region21: #{dqn_forward.1} parent=0 // pred_fallthru
    _
  // Predicated region
  $region22: #{dqn_forward.1} parent=0 // pred_check
    _
  $region23: #{dqn_forward.1} parent=0 // pred_check_branch
    %23 = sbr.rel (0) target = $region25
  $region24: #{dqn_forward.1} parent=0 // pred_region
    _
  $region25: #{dqn_forward.1} parent=0 // pred_fallthru
    _
  // Predicated region
  $region26: #{dqn_forward.1} parent=0 // pred_check
    _
  $region27: #{dqn_forward.1} parent=0 // pred_check_branch
    %25 = sbr.rel (0) target = $region29
  $region28: #{dqn_forward.1} parent=0 // pred_region
    _
  $region29: #{dqn_forward.1} parent=0 // pred_fallthru
    _
  %v27 = vld [vmem:[%s0] sm:$0xff]
  %v28 = vld [vmem:[%s0 + $0x8] sm:$0xff]
  %v29 = vld [vmem:[%s0 + $0x10] sm:$0xff]
  %v30 = vld [vmem:[%s0 + $0x18] sm:$0xff]
  %v31 = vld [vmem:[%s0 + $0x20] sm:$0xff]
  %v32 = vld [vmem:[%s0 + $0x28] sm:$0xff]
  %v33 = vld [vmem:[%s0 + $0x30] sm:$0xff]
  %v34 = vld [vmem:[%s0 + $0x38] sm:$0xff]
  %v35 = vpack.c.bf16 %v28, %v27
  %v36 = vpack.c.bf16 %v30, %v29
  %v37 = vpack.c.bf16 %v32, %v31
  %v38 = vpack.c.bf16 %v34, %v33
  %v39 = vld [vmem:[%s1] sm:$0xf]
  %v40 = vld [vmem:[%s2] sm:$0x1]
  %v42 = vlaneseq
  %v43 = vshrl.u32 %v42, 7
  %v44 = vsub.s32 0, %v43
  %v45 = vrot.slane %v40, %v44
  %vm47 = vcmask 64512
  %v49 = vsel %vm47, %v35, 0
  %v52 = vsel %vm47, %v36, 0
  %v55 = vsel %vm47, %v37, 0
  %v58 = vsel %vm47, %v38, 0
  %vm60 = vcmask 1043456
  %v62 = vsel %vm60, %v39, 0
  %64 = vmatprep.subr.bf16.mxu0 0
  %65 = vmatpush1.bf16.msra.mxu0 %v62
  %66 = vmatprep.subr.bf16.mxu0 0
  %67 = vmatpush1.bf16.msra.mxu0 0
  %68 = vmatprep.subr.bf16.mxu0 0
  %69 = vmatpush1.bf16.msra.mxu0 0
  %70 = vmatprep.subr.bf16.mxu0 0
  %71 = vmatpush1.bf16.msra.mxu0 0
  %72 = vmatprep.subr.bf16.mxu0 0
  %73 = vmatpush1.bf16.msra.mxu0 0
  %74 = vmatprep.subr.bf16.mxu0 0
  %75 = vmatpush1.bf16.msra.mxu0 0
  %76 = vmatprep.subr.bf16.mxu0 0
  %77 = vmatpush1.bf16.msra.mxu0 0
  %78 = vmatprep.subr.bf16.mxu0 0
  %79 = vmatpush1.bf16.msra.mxu0 0
  %80 = vmatprep.subr.bf16.mxu0 0
  %81 = vmatpush1.bf16.msra.mxu0 0
  %82 = vmatprep.subr.bf16.mxu0 0
  %83 = vmatpush1.bf16.msra.mxu0 0
  %84 = vmatprep.subr.bf16.mxu0 0
  %85 = vmatpush1.bf16.msra.mxu0 0
  %86 = vmatprep.subr.bf16.mxu0 0
  %87 = vmatpush1.bf16.msra.mxu0 0
  %88 = vmatprep.subr.bf16.mxu0 0
  %89 = vmatpush1.bf16.msra.mxu0 0
  %90 = vmatprep.subr.bf16.mxu0 0
  %91 = vmatpush1.bf16.msra.mxu0 0
  %92 = vmatprep.subr.bf16.mxu0 0
  %93 = vmatpush1.bf16.msra.mxu0 0
  %94 = vmatprep.subr.bf16.mxu0 0
  %95 = vmatpush1.bf16.msra.mxu0 0
  %96 = vmatprep.mubr.bf16.mxu0 0
  %97 = vmatmul.mubr.bf16.gmra.mrb[0].mxu0 %v49
  %v98 = vpop.f32.mrb[0].mxu0
  %v99 = vadd.f32 %v45, %v98
  %v100 = vpop.f32.mrb[0].mxu0
  %v101 = vpop.f32.mrb[0].mxu0
  %v102 = vadd.f32 %v45, %v101
  %v103 = vpop.f32.mrb[0].mxu0
  %104 = vmatprep.mubr.bf16.mxu0 0
  %105 = vmatmul.mubr.bf16.gmra.mrb[0].mxu0 %v52
  %v106 = vpop.f32.mrb[0].mxu0
  %v107 = vadd.f32 %v45, %v106
  %v108 = vpop.f32.mrb[0].mxu0
  %v109 = vpop.f32.mrb[0].mxu0
  %v110 = vadd.f32 %v45, %v109
  %v111 = vpop.f32.mrb[0].mxu0
  %112 = vmatprep.mubr.bf16.mxu0 0
  %113 = vmatmul.mubr.bf16.gmra.mrb[0].mxu0 %v55
  %v114 = vpop.f32.mrb[0].mxu0
  %v115 = vadd.f32 %v45, %v114
  %v116 = vpop.f32.mrb[0].mxu0
  %v117 = vpop.f32.mrb[0].mxu0
  %v118 = vadd.f32 %v45, %v117
  %v119 = vpop.f32.mrb[0].mxu0
  %120 = vmatprep.mubr.bf16.mxu0 0
  %121 = vmatmul.mubr.bf16.gmra.mrb[0].mxu0 %v58
  %v122 = vpop.f32.mrb[0].mxu0
  %v123 = vadd.f32 %v45, %v122
  %v124 = vpop.f32.mrb[0].mxu0
  %v125 = vpop.f32.mrb[0].mxu0
  %v126 = vadd.f32 %v45, %v125
  %v127 = vpop.f32.mrb[0].mxu0
  %128 = vdwg.mxu0
  %v129 = vmax.f32 %v99, 0.0
  %v130 = vmax.f32 %v102, 0.0
  %v131 = vmax.f32 %v107, 0.0
  %v132 = vmax.f32 %v110, 0.0
  %v133 = vmax.f32 %v115, 0.0
  %v134 = vmax.f32 %v118, 0.0
  %v135 = vmax.f32 %v123, 0.0
  %v136 = vmax.f32 %v126, 0.0
  %v137 = vpack.c.bf16 %v130, %v129
  %v138 = vpack.c.bf16 %v132, %v131
  %v139 = vpack.c.bf16 %v134, %v133
  %v140 = vpack.c.bf16 %v136, %v135
  %v141 = vld [vmem:[%s3] sm:$0xf]
  %v142 = vld [vmem:[%s3 + $0x4] sm:$0xf]
  %v143 = vld [vmem:[%s3 + $0x8] sm:$0xf]
  %v144 = vld [vmem:[%s3 + $0xc] sm:$0xf]
  %v145 = vld [vmem:[%s3 + $0x10] sm:$0xf]
  %v146 = vld [vmem:[%s3 + $0x14] sm:$0xf]
  %v147 = vld [vmem:[%s3 + $0x18] sm:$0xf]
  %v148 = vld [vmem:[%s3 + $0x1c] sm:$0xf]
  %v149 = vld [vmem:[%s3 + $0x20] sm:$0xf]
  %v150 = vld [vmem:[%s3 + $0x24] sm:$0xf]
  %v151 = vld [vmem:[%s3 + $0x28] sm:$0xf]
  %v152 = vld [vmem:[%s3 + $0x2c] sm:$0xf]
  %v153 = vld [vmem:[%s3 + $0x30] sm:$0xf]
  %v154 = vld [vmem:[%s3 + $0x34] sm:$0xf]
  %v155 = vld [vmem:[%s3 + $0x38] sm:$0xf]
  %v156 = vld [vmem:[%s3 + $0x3c] sm:$0xf]
  %v157 = vld [vmem:[%s4] sm:$0x1]
  %v159 = vlaneseq
  %v160 = vshrl.u32 %v159, 7
  %v161 = vsub.s32 0, %v160
  %v162 = vrot.slane %v157, %v161
  %v180 = vunpack.c.l.b16 %v141
  %v181 = vunpack.c.l.b16 %v142
  %v182 = vunpack.c.l.b16 %v143
  %v183 = vunpack.c.l.b16 %v144
  %v184 = vunpack.c.l.b16 %v145
  %v185 = vunpack.c.l.b16 %v146
  %v186 = vunpack.c.l.b16 %v147
  %v187 = vunpack.c.l.b16 %v148
  %v188 = vunpack.c.l.b16 %v149
  %v189 = vunpack.c.l.b16 %v150
  %v190 = vunpack.c.l.b16 %v151
  %v191 = vunpack.c.l.b16 %v152
  %v192 = vunpack.c.l.b16 %v153
  %v193 = vunpack.c.l.b16 %v154
  %v194 = vunpack.c.l.b16 %v155
  %v195 = vunpack.c.l.b16 %v156
  %v196 = vpack.c.b16 %v181, %v180
  %v197 = vpack.c.b16 %v183, %v182
  %v198 = vpack.c.b16 %v185, %v184
  %v199 = vpack.c.b16 %v187, %v186
  %v200 = vpack.c.b16 %v189, %v188
  %v201 = vpack.c.b16 %v191, %v190
  %v202 = vpack.c.b16 %v193, %v192
  %v203 = vpack.c.b16 %v195, %v194
  %212 = vmatprep.subr.bf16.mxu0 0
  %213 = vmatpush1.bf16.msra.mxu0 %v196
  %214 = vmatprep.subr.bf16.mxu0 0
  %215 = vmatpush1.bf16.msra.mxu0 %v197
  %216 = vmatprep.subr.bf16.mxu0 0
  %217 = vmatpush1.bf16.msra.mxu0 %v198
  %218 = vmatprep.subr.bf16.mxu0 0
  %219 = vmatpush1.bf16.msra.mxu0 %v199
  %220 = vmatprep.subr.bf16.mxu0 0
  %221 = vmatpush1.bf16.msra.mxu0 %v200
  %222 = vmatprep.subr.bf16.mxu0 0
  %223 = vmatpush1.bf16.msra.mxu0 %v201
  %224 = vmatprep.subr.bf16.mxu0 0
  %225 = vmatpush1.bf16.msra.mxu0 %v202
  %226 = vmatprep.subr.bf16.mxu0 0
  %227 = vmatpush1.bf16.msra.mxu0 %v203
  %228 = vmatprep.subr.bf16.mxu0 0
  %229 = vmatpush1.bf16.msra.mxu0 0
  %230 = vmatprep.subr.bf16.mxu0 0
  %231 = vmatpush1.bf16.msra.mxu0 0
  %232 = vmatprep.subr.bf16.mxu0 0
  %233 = vmatpush1.bf16.msra.mxu0 0
  %234 = vmatprep.subr.bf16.mxu0 0
  %235 = vmatpush1.bf16.msra.mxu0 0
  %236 = vmatprep.subr.bf16.mxu0 0
  %237 = vmatpush1.bf16.msra.mxu0 0
  %238 = vmatprep.subr.bf16.mxu0 0
  %239 = vmatpush1.bf16.msra.mxu0 0
  %240 = vmatprep.subr.bf16.mxu0 0
  %241 = vmatpush1.bf16.msra.mxu0 0
  %242 = vmatprep.subr.bf16.mxu0 0
  %243 = vmatpush1.bf16.msra.mxu0 0
  %244 = vmatprep.mubr.bf16.mxu0 0
  %245 = vmatmul.mubr.bf16.gmra.mrb[0].mxu0 %v137
  %v246 = vpop.f32.mrb[0].mxu0
  %v247 = vadd.f32 %v162, %v246
  %v248 = vpop.f32.mrb[0].mxu0
  %v249 = vpop.f32.mrb[0].mxu0
  %v250 = vadd.f32 %v162, %v249
  %v251 = vpop.f32.mrb[0].mxu0
  %252 = vmatprep.mubr.bf16.mxu0 0
  %253 = vmatmul.mubr.bf16.gmra.mrb[0].mxu0 %v138
  %v254 = vpop.f32.mrb[0].mxu0
  %v255 = vadd.f32 %v162, %v254
  %v256 = vpop.f32.mrb[0].mxu0
  %v257 = vpop.f32.mrb[0].mxu0
  %v258 = vadd.f32 %v162, %v257
  %v259 = vpop.f32.mrb[0].mxu0
  %260 = vmatprep.mubr.bf16.mxu0 0
  %261 = vmatmul.mubr.bf16.gmra.mrb[0].mxu0 %v139
  %v262 = vpop.f32.mrb[0].mxu0
  %v263 = vadd.f32 %v162, %v262
  %v264 = vpop.f32.mrb[0].mxu0
  %v265 = vpop.f32.mrb[0].mxu0
  %v266 = vadd.f32 %v162, %v265
  %v267 = vpop.f32.mrb[0].mxu0
  %268 = vmatprep.mubr.bf16.mxu0 0
  %269 = vmatmul.mubr.bf16.gmra.mrb[0].mxu0 %v140
  %v270 = vpop.f32.mrb[0].mxu0
  %v271 = vadd.f32 %v162, %v270
  %v272 = vpop.f32.mrb[0].mxu0
  %v273 = vpop.f32.mrb[0].mxu0
  %v274 = vadd.f32 %v162, %v273
  %v275 = vpop.f32.mrb[0].mxu0
  %276 = vdwg.mxu0
  %v277 = vmax.f32 %v247, 0.0
  %v278 = vmax.f32 %v250, 0.0
  %v279 = vmax.f32 %v255, 0.0
  %v280 = vmax.f32 %v258, 0.0
  %v281 = vmax.f32 %v263, 0.0
  %v282 = vmax.f32 %v266, 0.0
  %v283 = vmax.f32 %v271, 0.0
  %v284 = vmax.f32 %v274, 0.0
  %v285 = vpack.c.bf16 %v278, %v277
  %v286 = vpack.c.bf16 %v280, %v279
  %v287 = vpack.c.bf16 %v282, %v281
  %v288 = vpack.c.bf16 %v284, %v283
  %v289 = vld [vmem:[%s5] sm:$0xf]
  %v290 = vld [vmem:[%s5 + $0x4] sm:$0xf]
  %v291 = vld [vmem:[%s5 + $0x8] sm:$0xf]
  %v292 = vld [vmem:[%s5 + $0xc] sm:$0xf]
  %v293 = vld [vmem:[%s5 + $0x10] sm:$0xf]
  %v294 = vld [vmem:[%s5 + $0x14] sm:$0xf]
  %v295 = vld [vmem:[%s5 + $0x18] sm:$0xf]
  %v296 = vld [vmem:[%s5 + $0x1c] sm:$0xf]
  %v297 = vld [vmem:[%s5 + $0x20] sm:$0xf]
  %v298 = vld [vmem:[%s5 + $0x24] sm:$0xf]
  %v299 = vld [vmem:[%s5 + $0x28] sm:$0xf]
  %v300 = vld [vmem:[%s5 + $0x2c] sm:$0xf]
  %v301 = vld [vmem:[%s5 + $0x30] sm:$0xf]
  %v302 = vld [vmem:[%s5 + $0x34] sm:$0xf]
  %v303 = vld [vmem:[%s5 + $0x38] sm:$0xf]
  %v304 = vld [vmem:[%s5 + $0x3c] sm:$0xf]
  %v305 = vld [vmem:[%s6] sm:$0x1]
  %v307 = vlaneseq
  %v308 = vshrl.u32 %v307, 7
  %v309 = vsub.s32 0, %v308
  %v310 = vrot.slane %v305, %v309
  %v328 = vunpack.c.l.b16 %v289
  %v329 = vunpack.c.l.b16 %v290
  %v330 = vunpack.c.l.b16 %v291
  %v331 = vunpack.c.l.b16 %v292
  %v332 = vunpack.c.l.b16 %v293
  %v333 = vunpack.c.l.b16 %v294
  %v334 = vunpack.c.l.b16 %v295
  %v335 = vunpack.c.l.b16 %v296
  %v336 = vunpack.c.l.b16 %v297
  %v337 = vunpack.c.l.b16 %v298
  %v338 = vunpack.c.l.b16 %v299
  %v339 = vunpack.c.l.b16 %v300
  %v340 = vunpack.c.l.b16 %v301
  %v341 = vunpack.c.l.b16 %v302
  %v342 = vunpack.c.l.b16 %v303
  %v343 = vunpack.c.l.b16 %v304
  %v344 = vpack.c.b16 %v329, %v328
  %v345 = vpack.c.b16 %v331, %v330
  %v346 = vpack.c.b16 %v333, %v332
  %v347 = vpack.c.b16 %v335, %v334
  %v348 = vpack.c.b16 %v337, %v336
  %v349 = vpack.c.b16 %v339, %v338
  %v350 = vpack.c.b16 %v341, %v340
  %v351 = vpack.c.b16 %v343, %v342
  %360 = vmatprep.subr.bf16.mxu0 0
  %361 = vmatpush1.bf16.msra.mxu0 %v344
  %362 = vmatprep.subr.bf16.mxu0 0
  %363 = vmatpush1.bf16.msra.mxu0 %v345
  %364 = vmatprep.subr.bf16.mxu0 0
  %365 = vmatpush1.bf16.msra.mxu0 %v346
  %366 = vmatprep.subr.bf16.mxu0 0
  %367 = vmatpush1.bf16.msra.mxu0 %v347
  %368 = vmatprep.subr.bf16.mxu0 0
  %369 = vmatpush1.bf16.msra.mxu0 %v348
  %370 = vmatprep.subr.bf16.mxu0 0
  %371 = vmatpush1.bf16.msra.mxu0 %v349
  %372 = vmatprep.subr.bf16.mxu0 0
  %373 = vmatpush1.bf16.msra.mxu0 %v350
  %374 = vmatprep.subr.bf16.mxu0 0
  %375 = vmatpush1.bf16.msra.mxu0 %v351
  %376 = vmatprep.subr.bf16.mxu0 0
  %377 = vmatpush1.bf16.msra.mxu0 0
  %378 = vmatprep.subr.bf16.mxu0 0
  %379 = vmatpush1.bf16.msra.mxu0 0
  %380 = vmatprep.subr.bf16.mxu0 0
  %381 = vmatpush1.bf16.msra.mxu0 0
  %382 = vmatprep.subr.bf16.mxu0 0
  %383 = vmatpush1.bf16.msra.mxu0 0
  %384 = vmatprep.subr.bf16.mxu0 0
  %385 = vmatpush1.bf16.msra.mxu0 0
  %386 = vmatprep.subr.bf16.mxu0 0
  %387 = vmatpush1.bf16.msra.mxu0 0
  %388 = vmatprep.subr.bf16.mxu0 0
  %389 = vmatpush1.bf16.msra.mxu0 0
  %390 = vmatprep.subr.bf16.mxu0 0
  %391 = vmatpush1.bf16.msra.mxu0 0
  %392 = vmatprep.mubr.bf16.mxu0 0
  %393 = vmatmul.mubr.bf16.gmra.mrb[0].mxu0 %v285
  %v394 = vpop.f32.mrb[0].mxu0
  %v395 = vadd.f32 %v310, %v394
  %v396 = vpop.f32.mrb[0].mxu0
  %v397 = vpop.f32.mrb[0].mxu0
  %v398 = vadd.f32 %v310, %v397
  %v399 = vpop.f32.mrb[0].mxu0
  %400 = vmatprep.mubr.bf16.mxu0 0
  %401 = vmatmul.mubr.bf16.gmra.mrb[0].mxu0 %v286
  %v402 = vpop.f32.mrb[0].mxu0
  %v403 = vadd.f32 %v310, %v402
  %v404 = vpop.f32.mrb[0].mxu0
  %v405 = vpop.f32.mrb[0].mxu0
  %v406 = vadd.f32 %v310, %v405
  %v407 = vpop.f32.mrb[0].mxu0
  %408 = vmatprep.mubr.bf16.mxu0 0
  %409 = vmatmul.mubr.bf16.gmra.mrb[0].mxu0 %v287
  %v410 = vpop.f32.mrb[0].mxu0
  %v411 = vadd.f32 %v310, %v410
  %v412 = vpop.f32.mrb[0].mxu0
  %v413 = vpop.f32.mrb[0].mxu0
  %v414 = vadd.f32 %v310, %v413
  %v415 = vpop.f32.mrb[0].mxu0
  %416 = vmatprep.mubr.bf16.mxu0 0
  %417 = vmatmul.mubr.bf16.gmra.mrb[0].mxu0 %v288
  %v418 = vpop.f32.mrb[0].mxu0
  %v419 = vadd.f32 %v310, %v418
  %v420 = vpop.f32.mrb[0].mxu0
  %v421 = vpop.f32.mrb[0].mxu0
  %v422 = vadd.f32 %v310, %v421
  %v423 = vpop.f32.mrb[0].mxu0
  %424 = vdwg.mxu0
  %vm425 = vcmask 31744
  %426 = vst.msk [vmem:[%s7] sm:$0xff] %vm425, %v395
  %427 = vst.msk [vmem:[%s7 + $0x8] sm:$0xff] %vm425, %v398
  %428 = vst.msk [vmem:[%s7 + $0x10] sm:$0xff] %vm425, %v403
  %429 = vst.msk [vmem:[%s7 + $0x18] sm:$0xff] %vm425, %v406
  %430 = vst.msk [vmem:[%s7 + $0x20] sm:$0xff] %vm425, %v411
  %431 = vst.msk [vmem:[%s7 + $0x28] sm:$0xff] %vm425, %v414
  %432 = vst.msk [vmem:[%s7 + $0x30] sm:$0xff] %vm425, %v419
  %433 = vst.msk [vmem:[%s7 + $0x38] sm:$0xff] %vm425, %v422
  // Predicated region
  $region30: #{dqn_forward.1} parent=0 // pred_check
    _
  $region31: #{dqn_forward.1} parent=0 // pred_check_branch
    %435 = sbr.rel (0) target = $region33
  $region32: #{dqn_forward.1} parent=0 // pred_region
    _
  $region33: #{dqn_forward.1} parent=0 // pred_fallthru
    _
  // Predicated region
  $region34: #{dqn_forward.1} parent=0 // pred_check
    _
  $region35: #{dqn_forward.1} parent=0 // pred_check_branch
    %437 = sbr.rel (0) target = $region37
  $region36: #{dqn_forward.1} parent=0 // pred_region
    _
  $region37: #{dqn_forward.1} parent=0 // pred_fallthru
    _

</llo_original>
